<compile_context>
chip_gen: v7x
topology: tpu7x:2x2x1
jax: 0.10.0
libtpu: 0.0.40
codegen_flags: <defaults>
</compile_context>

<pallas_src>
import functools

import jax
import jax.numpy as jnp
from jax.experimental import pallas as pl
from jax.experimental.pallas import tpu as pltpu


def _round_up(n, m):
    return ((n + m - 1) // m) * m


def _pad2d(a, shape):
    return jnp.pad(a, [(0, t - s) for s, t in zip(a.shape, shape)])


def _mlp_kernel(seed_ref, x_ref, w1_ref, b1_ref, w2_ref, b2_ref, w3_ref, b3_ref,
                o_ref, *, keep_thresh, inv_keep, apply_dropout, matmul_dtype):
    tile = pl.program_id(0)

    def dropout(h, layer_tag):
        # Portable counter-based PRNG: hash (seed, tile, layer, element index)
        # into uniform uint32 bits, then one threshold compare + select.
        rows = jax.lax.broadcasted_iota(jnp.int32, h.shape, 0).astype(jnp.uint32)
        cols = jax.lax.broadcasted_iota(jnp.int32, h.shape, 1).astype(jnp.uint32)
        v = rows * jnp.uint32(h.shape[1]) + cols
        # Mix in seed / tile / layer with large odd constants so adjacent
        # tiles and layers get decorrelated streams.
        v = v ^ (seed_ref[0].astype(jnp.uint32) * jnp.uint32(0x9E3779B9))
        v = v + (tile + 1).astype(jnp.uint32) * jnp.uint32(0x85EBCA6B)
        v = v ^ (jnp.uint32(layer_tag) * jnp.uint32(0xC2B2AE35))
        # xxhash-style avalanche finalizer.
        v = v ^ (v >> 16)
        v = v * jnp.uint32(0x7FEB352D)
        v = v ^ (v >> 15)
        v = v * jnp.uint32(0x846CA68B)
        v = v ^ (v >> 16)
        keep = v < jnp.uint32(keep_thresh)
        return h * jnp.where(keep, inv_keep, 0.0)

    # fc1 -> relu -> dropout   (MXU in matmul_dtype, f32 accumulate/elementwise)
    xt = x_ref[...].astype(matmul_dtype)
    h1 = jnp.dot(xt, w1_ref[...], preferred_element_type=jnp.float32)
    h1 = jnp.maximum(h1 + b1_ref[...], 0.0)
    if apply_dropout:
        h1 = dropout(h1, 0x243F6A88)

    # fc2 -> relu -> dropout
    h2 = jnp.dot(h1.astype(matmul_dtype), w2_ref[...],
                 preferred_element_type=jnp.float32)
    h2 = jnp.maximum(h2 + b2_ref[...], 0.0)
    if apply_dropout:
        h2 = dropout(h2, 0x13198A2E)

    # fc3 (lane-padded to 128 wide on the MXU; only column 0 is real)
    logits = jnp.dot(h2.astype(matmul_dtype), w3_ref[...],
                     preferred_element_type=jnp.float32)
    logits = logits + b3_ref[...]

    # Pack the real column into lanes: (TB,128) -> (TB//128,128,128)
    # -> transpose each 128x128 block -> keep row 0 -> (TB//128,128).
    tb, dp = logits.shape
    blocks = logits.reshape(tb // 128, 128, dp)
    packed = jnp.swapaxes(blocks, 1, 2)[:, 0, :]       # packed[g, r] = logits[g*128+r, 0]
    o_ref[...] = jax.nn.sigmoid(packed)


def _resident_spec(shape):
    nd = len(shape)
    return pl.BlockSpec(shape, lambda i, seed: (0,) * nd)


def full_connect_binary(x, params, keepnode_prob, dropout_key, *,
                        block_batch=2048, matmul_dtype=jnp.bfloat16):
    """Training-mode forward pass of FullConnectBinary as one fused kernel.

    x: (B, D0) float32
    params: (w1, b1, w2, b2, w3, b3) with wi of shape (Di-1, Di)
            (transpose of nn.Linear.weight) and bi of shape (1, Di).
    Final layer width must be 1 (binary output).
    """
    w1, b1, w2, b2, w3, b3 = params
    B, D0 = x.shape
    D1, D2, D3 = w1.shape[1], w2.shape[1], w3.shape[1]
    if D3 != 1:
        raise ValueError("full_connect_binary packs a single output column (binary head).")

    # --- Pad hidden widths to multiples of 128; fc3 output padded to one full
    # 128-lane group.  Zero padding is exact (zeros flow through matmul/ReLU/
    # dropout as zeros).  Weights are pre-cast to the MXU dtype here so no
    # per-grid-step casts and only a bf16-sized resident copy in VMEM.
    D1p, D2p, D3p = _round_up(D1, 128), _round_up(D2, 128), 128
    w1p = _pad2d(w1, (D0, D1p)).astype(matmul_dtype)
    w2p = _pad2d(w2, (D1p, D2p)).astype(matmul_dtype)
    w3p = _pad2d(w3, (D2p, D3p)).astype(matmul_dtype)
    b1p = _pad2d(b1, (1, D1p))
    b2p = _pad2d(b2, (1, D2p))
    b3p = _pad2d(b3, (1, D3p))

    # --- Batch tiling.  TB must be a multiple of 128 (output packing); for
    # multi-step grids it is a multiple of 1024 so the packed output block
    # (TB//128, 128) stays (8,128)-aligned.
    B128 = _round_up(B, 128)
    if B128 <= block_batch:
        TB = B128                                   # single grid step
    else:
        TB = max(1024, _round_up(min(block_batch, B128), 1024))
    Bp = _round_up(B, TB)
    if Bp != B:
        x = jnp.pad(x, ((0, Bp - B), (0, 0)))
    grid = (Bp // TB,)

    # Scalar dropout seed, prefetched into SMEM.
    seed = jax.random.randint(dropout_key, (1,), 0,
                              jnp.iinfo(jnp.int32).max, dtype=jnp.int32)

    keep_prob = float(keepnode_prob)
    apply_dropout = keep_prob < 1.0
    keep_thresh = min(int(round(keep_prob * 4294967296.0)), 4294967295)

    kernel = functools.partial(
        _mlp_kernel,
        keep_thresh=keep_thresh,
        inv_keep=float(1.0 / keep_prob) if apply_dropout else 1.0,
        apply_dropout=apply_dropout,
        matmul_dtype=matmul_dtype,
    )

    # --- Cost estimate (helps XLA schedule around the call).
    mm_bytes = jnp.dtype(matmul_dtype).itemsize
    w_elems = D0 * D1p + D1p * D2p + D2p * D3p
    flops = 2 * Bp * w_elems
    bytes_accessed = (Bp * D0 * 4                 # x in
                      + (Bp // 128) * 128 * 4     # packed sigmoid out
                      + w_elems * mm_bytes
                      + (D1p + D2p + D3p) * 4)
    cost = pl.CostEstimate(flops=flops, transcendentals=Bp,
                           bytes_accessed=bytes_accessed)

    # --- VMEM footprint estimate; raise the scoped limit only when needed
    # (keeps v5e's 16 MiB / v7x's 32 MiB defaults for small tiles).
    vmem_est = (2 * TB * D0 * 4                       # double-buffered x tiles
                + 2 * (TB // 128) * 128 * 4           # double-buffered out tiles
                + 2 * w_elems * mm_bytes              # resident weights (buffered)
                + 2 * (D1p + D2p + D3p) * 4           # resident biases
                + 10 * TB * max(D1p, D2p) * 4)        # h1/h2/mask temporaries headroom
    cp_kwargs = dict(dimension_semantics=("parallel",))
    if vmem_est > 12 * (1 << 20):
        cp_kwargs["vmem_limit_bytes"] = min(int(vmem_est * 3 // 2), 96 * (1 << 20))

    out = pl.pallas_call(
        kernel,
        out_shape=jax.ShapeDtypeStruct((Bp // 128, 128), jnp.float32),
        grid_spec=pltpu.PrefetchScalarGridSpec(
            num_scalar_prefetch=1,
            grid=grid,
            in_specs=[
                pl.BlockSpec((TB, D0), lambda i, seed: (i, 0)),   # x: streamed f32
                _resident_spec(w1p.shape), _resident_spec(b1p.shape),
                _resident_spec(w2p.shape), _resident_spec(b2p.shape),
                _resident_spec(w3p.shape), _resident_spec(b3p.shape),
            ],
            out_specs=pl.BlockSpec((TB // 128, 128), lambda i, seed: (i, 0)),
        ),
        compiler_params=pltpu.CompilerParams(**cp_kwargs),
        cost_estimate=cost,
    )(seed, x, w1p, b1p, w2p, b2p, w3p, b3p)

    # Packed (Bp//128, 128) -> (Bp, 1) is a free row-major reshape; slice batch pad.
    return out.reshape(Bp, 1)[:B]


def init_params(key, layer_dims):
    """Deterministic init. Weights stored as (in, out); biases as (1, out)."""
    ks = jax.random.split(key, 6)
    d0, d1, d2, d3 = layer_dims[0], layer_dims[1], layer_dims[2], layer_dims[-1]

    def linear(kw, kb, fan_in, fan_out):
        # mimic nn.Linear's U(-1/sqrt(fan_in), 1/sqrt(fan_in)) init
        bound = 1.0 / jnp.sqrt(jnp.float32(fan_in))
        w = jax.random.uniform(kw, (fan_in, fan_out), jnp.float32, -bound, bound)
        b = jax.random.uniform(kb, (1, fan_out), jnp.float32, -bound, bound)
        return w, b

    w1, b1 = linear(ks[0], ks[1], d0, d1)
    w2, b2 = linear(ks[2], ks[3], d1, d2)
    w3, b3 = linear(ks[4], ks[5], d2, d3)
    return (w1, b1, w2, b2, w3, b3)


def _reference(x, params):
    w1, b1, w2, b2, w3, b3 = params
    h1 = jnp.maximum(x @ w1 + b1, 0.0)
    h2 = jnp.maximum(h1 @ w2 + b2, 0.0)
    return jax.nn.sigmoid(h2 @ w3 + b3)


if __name__ == "__main__":
    layer_dims = [32, 64, 32, 1]   # [in, hidden1, hidden2, out] -> binary output
    keepnode_prob = 0.8
    batch = 8

    root = jax.random.PRNGKey(0)
    k_param, k_x, k_drop = jax.random.split(root, 3)

    params = init_params(k_param, layer_dims)
    x = jax.random.normal(k_x, (batch, layer_dims[0]), jnp.float32)

    # Sanity check: dropout disabled (keep=1.0) + f32 matmuls must match the
    # pure-JAX reference.
    y_check = full_connect_binary(x, params, 1.0, k_drop,
                                  matmul_dtype=jnp.float32)
    y_ref = _reference(x, params)
    assert jnp.allclose(jax.block_until_ready(y_check), y_ref,
                        atol=1e-4, rtol=1e-4)

    # Training-mode forward: fused in-kernel dropout, bf16 MXU inputs.
    y = full_connect_binary(x, params, keepnode_prob, k_drop)
    y = jax.block_until_ready(y)

    assert y.shape == (batch, layer_dims[-1])
    assert bool(jnp.all((y >= 0.0) & (y <= 1.0)))
    print("KERNEL_OK")
</pallas_src>

<mosaic_0001>
module attributes {stable_mosaic.version = 11 : i64} {
  func.func @_mlp_kernel(%arg0: i32, %arg1: memref<1xi32, #tpu.memory_space<smem>>, %arg2: memref<128x32xf32, #tpu.memory_space<vmem>>, %arg3: memref<32x128xf32, #tpu.memory_space<vmem>>, %arg4: memref<1x128xf32, #tpu.memory_space<vmem>>, %arg5: memref<128x128xf32, #tpu.memory_space<vmem>>, %arg6: memref<1x128xf32, #tpu.memory_space<vmem>>, %arg7: memref<128x128xf32, #tpu.memory_space<vmem>>, %arg8: memref<1x128xf32, #tpu.memory_space<vmem>>, %arg9: memref<1x128xf32, #tpu.memory_space<vmem>>) attributes {dimension_semantics = [#tpu.dimension_semantics<parallel>], iteration_bounds = array<i64: 1>, scalar_prefetch = 1 : i64, scratch_operands = 0 : i64, tpu.core_type = #tpu.core_type<tc>, window_params = [{transform_indices = @transform_0, window_bounds = array<i64: 128, 32>}, {pipeline_mode = #tpu.pipeline_mode<synchronous>, transform_indices = @transform_1, window_bounds = array<i64: 32, 128>}, {pipeline_mode = #tpu.pipeline_mode<synchronous>, transform_indices = @transform_2, window_bounds = array<i64: 1, 128>}, {pipeline_mode = #tpu.pipeline_mode<synchronous>, transform_indices = @transform_3, window_bounds = array<i64: 128, 128>}, {pipeline_mode = #tpu.pipeline_mode<synchronous>, transform_indices = @transform_4, window_bounds = array<i64: 1, 128>}, {pipeline_mode = #tpu.pipeline_mode<synchronous>, transform_indices = @transform_5, window_bounds = array<i64: 128, 128>}, {pipeline_mode = #tpu.pipeline_mode<synchronous>, transform_indices = @transform_6, window_bounds = array<i64: 1, 128>}, {transform_indices = @transform_7, window_bounds = array<i64: 1, 128>}]} {
    %c0 = arith.constant 0 : index
    %c0_0 = arith.constant 0 : index
    %0 = vector.load %arg2[%c0, %c0_0] : memref<128x32xf32, #tpu.memory_space<vmem>>, vector<128x32xf32>
    %c0_1 = arith.constant 0 : index
    %c0_2 = arith.constant 0 : index
    %1 = vector.load %arg3[%c0_1, %c0_2] : memref<32x128xf32, #tpu.memory_space<vmem>>, vector<32x128xf32>
    %cst = arith.constant dense<0.000000e+00> : vector<128x128xf32>
    %2 = tpu.matmul %0, %1, %cst {dimension_numbers = #tpu.dot_dimension_numbers<[1], [0], [0], [1], [0, 0, 1, 1], [], []>} : vector<128x32xf32>, vector<32x128xf32>, vector<128x128xf32> -> vector<128x128xf32>
    %c0_3 = arith.constant 0 : index
    %c0_4 = arith.constant 0 : index
    %3 = vector.load %arg4[%c0_3, %c0_4] : memref<1x128xf32, #tpu.memory_space<vmem>>, vector<1x128xf32>
    %4 = vector.broadcast %3 : vector<1x128xf32> to vector<128x128xf32>
    %5 = arith.addf %2, %4 : vector<128x128xf32>
    %cst_5 = arith.constant 0.000000e+00 : f32
    %6 = vector.broadcast %cst_5 : f32 to vector<128x128xf32>
    %7 = arith.maximumf %5, %6 : vector<128x128xf32>
    %c0_6 = arith.constant 0 : index
    %c0_7 = arith.constant 0 : index
    %8 = vector.load %arg5[%c0_6, %c0_7] : memref<128x128xf32, #tpu.memory_space<vmem>>, vector<128x128xf32>
    %cst_8 = arith.constant dense<0.000000e+00> : vector<128x128xf32>
    %9 = tpu.matmul %7, %8, %cst_8 {dimension_numbers = #tpu.dot_dimension_numbers<[1], [0], [0], [1], [0, 0, 1, 1], [], []>} : vector<128x128xf32>, vector<128x128xf32>, vector<128x128xf32> -> vector<128x128xf32>
    %c0_9 = arith.constant 0 : index
    %c0_10 = arith.constant 0 : index
    %10 = vector.load %arg6[%c0_9, %c0_10] : memref<1x128xf32, #tpu.memory_space<vmem>>, vector<1x128xf32>
    %11 = vector.broadcast %10 : vector<1x128xf32> to vector<128x128xf32>
    %12 = arith.addf %9, %11 : vector<128x128xf32>
    %cst_11 = arith.constant 0.000000e+00 : f32
    %13 = vector.broadcast %cst_11 : f32 to vector<128x128xf32>
    %14 = arith.maximumf %12, %13 : vector<128x128xf32>
    %c0_12 = arith.constant 0 : index
    %c0_13 = arith.constant 0 : index
    %15 = vector.load %arg7[%c0_12, %c0_13] : memref<128x128xf32, #tpu.memory_space<vmem>>, vector<128x128xf32>
    %cst_14 = arith.constant dense<0.000000e+00> : vector<128x128xf32>
    %16 = tpu.matmul %14, %15, %cst_14 {dimension_numbers = #tpu.dot_dimension_numbers<[1], [0], [0], [1], [0, 0, 1, 1], [], []>} : vector<128x128xf32>, vector<128x128xf32>, vector<128x128xf32> -> vector<128x128xf32>
    %c0_15 = arith.constant 0 : index
    %c0_16 = arith.constant 0 : index
    %17 = vector.load %arg8[%c0_15, %c0_16] : memref<1x128xf32, #tpu.memory_space<vmem>>, vector<1x128xf32>
    %18 = vector.broadcast %17 : vector<1x128xf32> to vector<128x128xf32>
    %19 = arith.addf %16, %18 : vector<128x128xf32>
    %20 = vector.shape_cast %19 : vector<128x128xf32> to vector<1x128x128xf32>
    %21 = tpu.transpose %20, [0, 2, 1] : vector<1x128x128xf32> -> vector<1x128x128xf32>
    %22 = vector.extract_strided_slice %21 {offsets = [0, 0, 0], sizes = [1, 1, 128], strides = [1, 1, 1]} : vector<1x128x128xf32> to vector<1x1x128xf32>
    %23 = vector.shape_cast %22 : vector<1x1x128xf32> to vector<1x128xf32>
    %24 = arith.negf %23 : vector<1x128xf32>
    %25 = math.exp %24 : vector<1x128xf32>
    %cst_17 = arith.constant 1.000000e+00 : f32
    %26 = vector.broadcast %cst_17 : f32 to vector<1x128xf32>
    %27 = arith.addf %26, %25 : vector<1x128xf32>
    %28 = arith.divf %26, %27 : vector<1x128xf32>
    %c0_18 = arith.constant 0 : index
    %c0_19 = arith.constant 0 : index
    %29 = vector.load %arg9[%c0_18, %c0_19] : memref<1x128xf32, #tpu.memory_space<vmem>>, vector<1x128xf32>
    tpu.vector_store %arg9[%c0_18, %c0_19], %28 {strides = array<i32>} : memref<1x128xf32, #tpu.memory_space<vmem>>, vector<1x128xf32>,
    return
  }
  func.func @transform_0(%arg0: i32, %arg1: memref<1xi32, #tpu.memory_space<smem>>) -> (i32, i32) {
    %c0_i32 = arith.constant 0 : i32
    %c0_i32_0 = arith.constant 0 : i32
    return %arg0, %c0_i32 : i32, i32
  }
  func.func @transform_1(%arg0: i32, %arg1: memref<1xi32, #tpu.memory_space<smem>>) -> (i32, i32) {
    %c0_i32 = arith.constant 0 : i32
    %c0_i32_0 = arith.constant 0 : i32
    %c0_i32_1 = arith.constant 0 : i32
    return %c0_i32, %c0_i32_0 : i32, i32
  }
  func.func @transform_2(%arg0: i32, %arg1: memref<1xi32, #tpu.memory_space<smem>>) -> (i32, i32) {
    %c0_i32 = arith.constant 0 : i32
    %c0_i32_0 = arith.constant 0 : i32
    %c0_i32_1 = arith.constant 0 : i32
    return %c0_i32, %c0_i32_0 : i32, i32
  }
  func.func @transform_3(%arg0: i32, %arg1: memref<1xi32, #tpu.memory_space<smem>>) -> (i32, i32) {
    %c0_i32 = arith.constant 0 : i32
    %c0_i32_0 = arith.constant 0 : i32
    %c0_i32_1 = arith.constant 0 : i32
    return %c0_i32, %c0_i32_0 : i32, i32
  }
  func.func @transform_4(%arg0: i32, %arg1: memref<1xi32, #tpu.memory_space<smem>>) -> (i32, i32) {
    %c0_i32 = arith.constant 0 : i32
    %c0_i32_0 = arith.constant 0 : i32
    %c0_i32_1 = arith.constant 0 : i32
    return %c0_i32, %c0_i32_0 : i32, i32
  }
  func.func @transform_5(%arg0: i32, %arg1: memref<1xi32, #tpu.memory_space<smem>>) -> (i32, i32) {
    %c0_i32 = arith.constant 0 : i32
    %c0_i32_0 = arith.constant 0 : i32
    %c0_i32_1 = arith.constant 0 : i32
    return %c0_i32, %c0_i32_0 : i32, i32
  }
  func.func @transform_6(%arg0: i32, %arg1: memref<1xi32, #tpu.memory_space<smem>>) -> (i32, i32) {
    %c0_i32 = arith.constant 0 : i32
    %c0_i32_0 = arith.constant 0 : i32
    %c0_i32_1 = arith.constant 0 : i32
    return %c0_i32, %c0_i32_0 : i32, i32
  }
  func.func @transform_7(%arg0: i32, %arg1: memref<1xi32, #tpu.memory_space<smem>>) -> (i32, i32) {
    %c0_i32 = arith.constant 0 : i32
    %c0_i32_0 = arith.constant 0 : i32
    return %arg0, %c0_i32 : i32, i32
  }
}

</mosaic_0001>

<llo_original>
// kernel: tpu_custom_call.1
$region0: #{tpu_custom_call.1}
  #allocation0 [shape = 'u32[]', space=smem, size = 0x4, offset = 0x4, fixed_abs, tag = 'smem constant byte address 0x4 - core index']
  #allocation1 [shape = 'u32[144,128]{1,0:T(1,128)}', space=vmem, size = 0x12000, scoped, tag = 'internal scratch']
  #allocation2 [shape = 's32[1]{0}', space=sflag, size = 0x4, scoped, tag = 'scoped memory for tpu_custom_call.1']
  #allocation3 [shape = 's32[1]{0:T(128)S(6)}', space=smem, size = 0x200, scoped, tag = 'prefetched SMEM operand 0']
  %s0 = inlined_call_operand.<no memory space> [shape: s32[1], index: 0, kind: input, shape index: {}]
  %s1 = inlined_call_operand.vmem [shape: f32[128,32], index: 1, kind: input, shape index: {}]
  %s2 = inlined_call_operand.vmem [shape: f32[32,128], index: 2, kind: input, shape index: {}]
  %s3 = inlined_call_operand.vmem [shape: f32[1,128], index: 3, kind: input, shape index: {}]
  %s4 = inlined_call_operand.vmem [shape: f32[128,128], index: 4, kind: input, shape index: {}]
  %s5 = inlined_call_operand.vmem [shape: f32[1,128], index: 5, kind: input, shape index: {}]
  %s6 = inlined_call_operand.hbm [shape: f32[128,128], index: 6, kind: input, shape index: {}]
  %s7 = inlined_call_operand.vmem [shape: f32[1,128], index: 7, kind: input, shape index: {}]
  %s8 = inlined_call_operand.hbm [shape: f32[1,128], index: 8, kind: output, shape index: {}]
  %s9 = sld [smem:[#allocation0]]
  $region42: #{tpu_custom_call.1} parent=0
    _
  %s11 = ssub.s32 1, %s9
  %s12 = scalar_select 0, %s11, %s9
  %13 = sst [smem:[#allocation3]] %s0
  $region1: #{tpu_custom_call.1} parent=0
    #allocation4 [shape = 'u8[65536]{0}', space=vmem, size = 0x10000, scoped, tag = 'input window, operand 6, single buffered']
    #allocation5 [shape = 's32[1]{0}', space=sflag, size = 0x4, scoped, tag = 'scoped memory for tpu_custom_call.1']
    #allocation6 [shape = 's32[1]{0}', space=sflag, size = 0x4, scoped, tag = 'scoped memory for tpu_custom_call.1']
    #allocation7 [shape = 'u8[512]{0}', space=vmem, size = 0x400, scoped, tag = 'output window, operand 0, single buffered']
    %14 = vsyncpa [#allocation5], 0
    %15 = vsyncpa [#allocation6], 0
    // Predicated region
    $region2: #{tpu_custom_call.1} parent=1 // pred_check
      _
    $region3: #{tpu_custom_call.1} parent=1 // pred_check_branch
      %17 = sbr.rel (0) target = $region5
    $region4: #{tpu_custom_call.1} parent=1 // pred_region
      _
    $region5: #{tpu_custom_call.1} parent=1 // pred_fallthru
      _
    // Predicated region
    $region6: #{tpu_custom_call.1} parent=1 // pred_check
      _
    $region7: #{tpu_custom_call.1} parent=1 // pred_check_branch
      %19 = sbr.rel (0) target = $region9
    $region8: #{tpu_custom_call.1} parent=1 // pred_region
      _
    $region9: #{tpu_custom_call.1} parent=1 // pred_fallthru
      _
    // Predicated region
    $region10: #{tpu_custom_call.1} parent=1 // pred_check
      _
    $region11: #{tpu_custom_call.1} parent=1 // pred_check_branch
      %21 = sbr.rel (0) target = $region13
    $region12: #{tpu_custom_call.1} parent=1 // pred_region
      _
    $region13: #{tpu_custom_call.1} parent=1 // pred_fallthru
      _
    // Predicated region
    $region14: #{tpu_custom_call.1} parent=1 // pred_check
      _
    $region15: #{tpu_custom_call.1} parent=1 // pred_check_branch
      %23 = sbr.rel (0) target = $region17
    $region16: #{tpu_custom_call.1} parent=1 // pred_region
      _
    $region17: #{tpu_custom_call.1} parent=1 // pred_fallthru
      _
    // Predicated region
    $region18: #{tpu_custom_call.1} parent=1 // pred_check
      _
    $region19: #{tpu_custom_call.1} parent=1 // pred_check_branch
      %25 = sbr.rel (0) target = $region21
    $region20: #{tpu_custom_call.1} parent=1 // pred_region
      _
    $region21: #{tpu_custom_call.1} parent=1 // pred_fallthru
      _
    // Predicated region
    $region22: #{tpu_custom_call.1} parent=1 // pred_check
      _
    $region23: #{tpu_custom_call.1} parent=1 // pred_check_branch
      %27 = sbr.rel (0) target = $region25
    $region24: #{tpu_custom_call.1} parent=1 // pred_region
      %s29 = ssub.s32 2048, 2048
      %30 = vsyncadd [#allocation5], %s29
      %s31 = sshll.u32 [#allocation4], 4
      %s32 = int_to_ptr.vmem [resolvable:$true] %s31
      %37 = dma.hbm_to_vmem [thread:$0]  %s6, 2048, %s32, [#allocation5], 128, 128, 8
    $region25: #{tpu_custom_call.1} parent=1 // pred_fallthru
      _
    // Predicated region
    $region26: #{tpu_custom_call.1} parent=1 // pred_check
      _
    $region27: #{tpu_custom_call.1} parent=1 // pred_check_branch
      %39 = sbr.rel (0) target = $region29
    $region28: #{tpu_custom_call.1} parent=1 // pred_region
      _
    $region29: #{tpu_custom_call.1} parent=1 // pred_fallthru
      _
    // Predicated region
    $region30: #{tpu_custom_call.1} parent=1 // pred_check
      _
    $region31: #{tpu_custom_call.1} parent=1 // pred_check_branch
      %41 = sbr.rel (0) target = $region33
    $region32: #{tpu_custom_call.1} parent=1 // pred_region
      %42 = dma.done [#allocation5], 2048
    $region33: #{tpu_custom_call.1} parent=1 // pred_fallthru
      _
    %v43 = vld [vmem:[%s1] sm:$0xff]
    %v44 = vld [vmem:[%s1 + $0x8] sm:$0xff]
    %v45 = vld [vmem:[%s1 + $0x10] sm:$0xff]
    %v46 = vld [vmem:[%s1 + $0x18] sm:$0xff]
    %v47 = vld [vmem:[%s1 + $0x20] sm:$0xff]
    %v48 = vld [vmem:[%s1 + $0x28] sm:$0xff]
    %v49 = vld [vmem:[%s1 + $0x30] sm:$0xff]
    %v50 = vld [vmem:[%s1 + $0x38] sm:$0xff]
    %v51 = vld [vmem:[%s1 + $0x40] sm:$0xff]
    %v52 = vld [vmem:[%s1 + $0x48] sm:$0xff]
    %v53 = vld [vmem:[%s1 + $0x50] sm:$0xff]
    %v54 = vld [vmem:[%s1 + $0x58] sm:$0xff]
    %v55 = vld [vmem:[%s1 + $0x60] sm:$0xff]
    %v56 = vld [vmem:[%s1 + $0x68] sm:$0xff]
    %v57 = vld [vmem:[%s1 + $0x70] sm:$0xff]
    %v58 = vld [vmem:[%s1 + $0x78] sm:$0xff]
    %v59 = vld [vmem:[%s2] sm:$0xff]
    %v60 = vld [vmem:[%s2 + $0x8] sm:$0xff]
    %v61 = vld [vmem:[%s2 + $0x10] sm:$0xff]
    %v62 = vld [vmem:[%s2 + $0x18] sm:$0xff]
    %v63 = vld [vmem:[%s3] sm:$0x1]
    %v65 = vlaneseq
    %v66 = vshrl.u32 %v65, 7
    %v67 = vsub.s32 0, %v66
    %v68 = vrot.slane %v63, %v67
    %vm70 = vcmask 261120
    %v72 = vsel %vm70, %v43, 0
    %v75 = vsel %vm70, %v44, 0
    %v78 = vsel %vm70, %v45, 0
    %v81 = vsel %vm70, %v46, 0
    %v84 = vsel %vm70, %v47, 0
    %v87 = vsel %vm70, %v48, 0
    %v90 = vsel %vm70, %v49, 0
    %v93 = vsel %vm70, %v50, 0
    %v96 = vsel %vm70, %v51, 0
    %v99 = vsel %vm70, %v52, 0
    %v102 = vsel %vm70, %v53, 0
    %v105 = vsel %vm70, %v54, 0
    %v108 = vsel %vm70, %v55, 0
    %v111 = vsel %vm70, %v56, 0
    %v114 = vsel %vm70, %v57, 0
    %v117 = vsel %vm70, %v58, 0
    %119 = vmatprep.subr.mxu0 0.0
    %120 = vmatpush1.msra.mxu0 %v59
    %121 = vmatprep.subr.mxu0 0.0
    %122 = vmatpush1.msra.mxu0 %v60
    %123 = vmatprep.subr.mxu0 0.0
    %124 = vmatpush1.msra.mxu0 %v61
    %125 = vmatprep.subr.mxu0 0.0
    %126 = vmatpush1.msra.mxu0 %v62
    %127 = vmatprep.subr.mxu0 0.0
    %128 = vmatpush1.msra.mxu0 0.0
    %129 = vmatprep.subr.mxu0 0.0
    %130 = vmatpush1.msra.mxu0 0.0
    %131 = vmatprep.subr.mxu0 0.0
    %132 = vmatpush1.msra.mxu0 0.0
    %133 = vmatprep.subr.mxu0 0.0
    %134 = vmatpush1.msra.mxu0 0.0
    %135 = vmatprep.subr.mxu0 0.0
    %136 = vmatpush1.msra.mxu0 0.0
    %137 = vmatprep.subr.mxu0 0.0
    %138 = vmatpush1.msra.mxu0 0.0
    %139 = vmatprep.subr.mxu0 0.0
    %140 = vmatpush1.msra.mxu0 0.0
    %141 = vmatprep.subr.mxu0 0.0
    %142 = vmatpush1.msra.mxu0 0.0
    %143 = vmatprep.subr.mxu0 0.0
    %144 = vmatpush1.msra.mxu0 0.0
    %145 = vmatprep.subr.mxu0 0.0
    %146 = vmatpush1.msra.mxu0 0.0
    %147 = vmatprep.subr.mxu0 0.0
    %148 = vmatpush1.msra.mxu0 0.0
    %149 = vmatprep.subr.mxu0 0.0
    %150 = vmatpush1.msra.mxu0 0.0
    %151 = vmatprep.subr.mxu0 0.0
    %152 = vmatpush1.msra.mxu0 0.0
    %153 = vmatprep.subr.mxu0 0.0
    %154 = vmatpush1.msra.mxu0 0.0
    %155 = vmatprep.subr.mxu0 0.0
    %156 = vmatpush1.msra.mxu0 0.0
    %157 = vmatprep.subr.mxu0 0.0
    %158 = vmatpush1.msra.mxu0 0.0
    %159 = vmatprep.subr.mxu0 0.0
    %160 = vmatpush1.msra.mxu0 0.0
    %161 = vmatprep.subr.mxu0 0.0
    %162 = vmatpush1.msra.mxu0 0.0
    %163 = vmatprep.subr.mxu0 0.0
    %164 = vmatpush1.msra.mxu0 0.0
    %165 = vmatprep.subr.mxu0 0.0
    %166 = vmatpush1.msra.mxu0 0.0
    %167 = vmatprep.subr.mxu0 0.0
    %168 = vmatpush1.msra.mxu0 0.0
    %169 = vmatprep.subr.mxu0 0.0
    %170 = vmatpush1.msra.mxu0 0.0
    %171 = vmatprep.subr.mxu0 0.0
    %172 = vmatpush1.msra.mxu0 0.0
    %173 = vmatprep.subr.mxu0 0.0
    %174 = vmatpush1.msra.mxu0 0.0
    %175 = vmatprep.subr.mxu0 0.0
    %176 = vmatpush1.msra.mxu0 0.0
    %177 = vmatprep.subr.mxu0 0.0
    %178 = vmatpush1.msra.mxu0 0.0
    %179 = vmatprep.subr.mxu0 0.0
    %180 = vmatpush1.msra.mxu0 0.0
    %181 = vmatprep.subr.mxu0 0.0
    %182 = vmatpush1.msra.mxu0 0.0
    %183 = vmatprep.mubr.f32.mxu0 0.0
    %184 = vmatmul.mubr.f32.gmra.mrb[0].mxu0 %v72
    %v185 = vpop.f32.mrb[0].mxu0
    %v186 = vadd.f32 %v68, %v185
    %v187 = vpop.f32.mrb[0].mxu0
    %188 = vmatprep.mubr.f32.mxu0 0.0
    %189 = vmatmul.mubr.f32.gmra.mrb[0].mxu0 %v75
    %v190 = vpop.f32.mrb[0].mxu0
    %v191 = vadd.f32 %v68, %v190
    %v192 = vpop.f32.mrb[0].mxu0
    %193 = vmatprep.mubr.f32.mxu0 0.0
    %194 = vmatmul.mubr.f32.gmra.mrb[0].mxu0 %v78
    %v195 = vpop.f32.mrb[0].mxu0
    %v196 = vadd.f32 %v68, %v195
    %v197 = vpop.f32.mrb[0].mxu0
    %198 = vmatprep.mubr.f32.mxu0 0.0
    %199 = vmatmul.mubr.f32.gmra.mrb[0].mxu0 %v81
    %v200 = vpop.f32.mrb[0].mxu0
    %v201 = vadd.f32 %v68, %v200
    %v202 = vpop.f32.mrb[0].mxu0
    %203 = vmatprep.mubr.f32.mxu0 0.0
    %204 = vmatmul.mubr.f32.gmra.mrb[0].mxu0 %v84
    %v205 = vpop.f32.mrb[0].mxu0
    %v206 = vadd.f32 %v68, %v205
    %v207 = vpop.f32.mrb[0].mxu0
    %208 = vmatprep.mubr.f32.mxu0 0.0
    %209 = vmatmul.mubr.f32.gmra.mrb[0].mxu0 %v87
    %v210 = vpop.f32.mrb[0].mxu0
    %v211 = vadd.f32 %v68, %v210
    %v212 = vpop.f32.mrb[0].mxu0
    %213 = vmatprep.mubr.f32.mxu0 0.0
    %214 = vmatmul.mubr.f32.gmra.mrb[0].mxu0 %v90
    %v215 = vpop.f32.mrb[0].mxu0
    %v216 = vadd.f32 %v68, %v215
    %v217 = vpop.f32.mrb[0].mxu0
    %218 = vmatprep.mubr.f32.mxu0 0.0
    %219 = vmatmul.mubr.f32.gmra.mrb[0].mxu0 %v93
    %v220 = vpop.f32.mrb[0].mxu0
    %v221 = vadd.f32 %v68, %v220
    %v222 = vpop.f32.mrb[0].mxu0
    %223 = vmatprep.mubr.f32.mxu0 0.0
    %224 = vmatmul.mubr.f32.gmra.mrb[0].mxu0 %v96
    %v225 = vpop.f32.mrb[0].mxu0
    %v226 = vadd.f32 %v68, %v225
    %v227 = vpop.f32.mrb[0].mxu0
    %228 = vmatprep.mubr.f32.mxu0 0.0
    %229 = vmatmul.mubr.f32.gmra.mrb[0].mxu0 %v99
    %v230 = vpop.f32.mrb[0].mxu0
    %v231 = vadd.f32 %v68, %v230
    %v232 = vpop.f32.mrb[0].mxu0
    %233 = vmatprep.mubr.f32.mxu0 0.0
    %234 = vmatmul.mubr.f32.gmra.mrb[0].mxu0 %v102
    %v235 = vpop.f32.mrb[0].mxu0
    %v236 = vadd.f32 %v68, %v235
    %v237 = vpop.f32.mrb[0].mxu0
    %238 = vmatprep.mubr.f32.mxu0 0.0
    %239 = vmatmul.mubr.f32.gmra.mrb[0].mxu0 %v105
    %v240 = vpop.f32.mrb[0].mxu0
    %v241 = vadd.f32 %v68, %v240
    %v242 = vpop.f32.mrb[0].mxu0
    %243 = vmatprep.mubr.f32.mxu0 0.0
    %244 = vmatmul.mubr.f32.gmra.mrb[0].mxu0 %v108
    %v245 = vpop.f32.mrb[0].mxu0
    %v246 = vadd.f32 %v68, %v245
    %v247 = vpop.f32.mrb[0].mxu0
    %248 = vmatprep.mubr.f32.mxu0 0.0
    %249 = vmatmul.mubr.f32.gmra.mrb[0].mxu0 %v111
    %v250 = vpop.f32.mrb[0].mxu0
    %v251 = vadd.f32 %v68, %v250
    %v252 = vpop.f32.mrb[0].mxu0
    %253 = vmatprep.mubr.f32.mxu0 0.0
    %254 = vmatmul.mubr.f32.gmra.mrb[0].mxu0 %v114
    %v255 = vpop.f32.mrb[0].mxu0
    %v256 = vadd.f32 %v68, %v255
    %v257 = vpop.f32.mrb[0].mxu0
    %258 = vmatprep.mubr.f32.mxu0 0.0
    %259 = vmatmul.mubr.f32.gmra.mrb[0].mxu0 %v117
    %v260 = vpop.f32.mrb[0].mxu0
    %v261 = vadd.f32 %v68, %v260
    %v262 = vpop.f32.mrb[0].mxu0
    %263 = vdwg.mxu0
    %v264 = vmax.f32 %v186, 0.0
    %v265 = vmax.f32 %v191, 0.0
    %v266 = vmax.f32 %v196, 0.0
    %v267 = vmax.f32 %v201, 0.0
    %v268 = vmax.f32 %v206, 0.0
    %v269 = vmax.f32 %v211, 0.0
    %v270 = vmax.f32 %v216, 0.0
    %v271 = vmax.f32 %v221, 0.0
    %v272 = vmax.f32 %v226, 0.0
    %v273 = vmax.f32 %v231, 0.0
    %v274 = vmax.f32 %v236, 0.0
    %v275 = vmax.f32 %v241, 0.0
    %v276 = vmax.f32 %v246, 0.0
    %v277 = vmax.f32 %v251, 0.0
    %v278 = vmax.f32 %v256, 0.0
    %v279 = vmax.f32 %v261, 0.0
    %v280 = vld [vmem:[%s4] sm:$0xff]
    %v281 = vld [vmem:[%s4 + $0x8] sm:$0xff]
    %v282 = vld [vmem:[%s4 + $0x10] sm:$0xff]
    %v283 = vld [vmem:[%s4 + $0x18] sm:$0xff]
    %v284 = vld [vmem:[%s4 + $0x20] sm:$0xff]
    %v285 = vld [vmem:[%s4 + $0x28] sm:$0xff]
    %v286 = vld [vmem:[%s4 + $0x30] sm:$0xff]
    %v287 = vld [vmem:[%s4 + $0x38] sm:$0xff]
    %v288 = vld [vmem:[%s4 + $0x40] sm:$0xff]
    %v289 = vld [vmem:[%s4 + $0x48] sm:$0xff]
    %v290 = vld [vmem:[%s4 + $0x50] sm:$0xff]
    %v291 = vld [vmem:[%s4 + $0x58] sm:$0xff]
    %v292 = vld [vmem:[%s4 + $0x60] sm:$0xff]
    %v293 = vld [vmem:[%s4 + $0x68] sm:$0xff]
    %v294 = vld [vmem:[%s4 + $0x70] sm:$0xff]
    %v295 = vld [vmem:[%s4 + $0x78] sm:$0xff]
    %v296 = vld [vmem:[%s5] sm:$0x1]
    %v298 = vlaneseq
    %v299 = vshrl.u32 %v298, 7
    %v300 = vsub.s32 0, %v299
    %v301 = vrot.slane %v296, %v300
    %303 = vmatprep.subr.mxu0 0.0
    %304 = vmatpush1.msra.mxu0 %v280
    %305 = vmatprep.subr.mxu0 0.0
    %306 = vmatpush1.msra.mxu0 %v281
    %307 = vmatprep.subr.mxu0 0.0
    %308 = vmatpush1.msra.mxu0 %v282
    %309 = vmatprep.subr.mxu0 0.0
    %310 = vmatpush1.msra.mxu0 %v283
    %311 = vmatprep.subr.mxu0 0.0
    %312 = vmatpush1.msra.mxu0 %v284
    %313 = vmatprep.subr.mxu0 0.0
    %314 = vmatpush1.msra.mxu0 %v285
    %315 = vmatprep.subr.mxu0 0.0
    %316 = vmatpush1.msra.mxu0 %v286
    %317 = vmatprep.subr.mxu0 0.0
    %318 = vmatpush1.msra.mxu0 %v287
    %319 = vmatprep.subr.mxu0 0.0
    %320 = vmatpush1.msra.mxu0 %v288
    %321 = vmatprep.subr.mxu0 0.0
    %322 = vmatpush1.msra.mxu0 %v289
    %323 = vmatprep.subr.mxu0 0.0
    %324 = vmatpush1.msra.mxu0 %v290
    %325 = vmatprep.subr.mxu0 0.0
    %326 = vmatpush1.msra.mxu0 %v291
    %327 = vmatprep.subr.mxu0 0.0
    %328 = vmatpush1.msra.mxu0 %v292
    %329 = vmatprep.subr.mxu0 0.0
    %330 = vmatpush1.msra.mxu0 %v293
    %331 = vmatprep.subr.mxu0 0.0
    %332 = vmatpush1.msra.mxu0 %v294
    %333 = vmatprep.subr.mxu0 0.0
    %334 = vmatpush1.msra.mxu0 %v295
    %335 = vmatprep.subr.mxu0 0.0
    %336 = vmatpush1.msra.mxu0 0.0
    %337 = vmatprep.subr.mxu0 0.0
    %338 = vmatpush1.msra.mxu0 0.0
    %339 = vmatprep.subr.mxu0 0.0
    %340 = vmatpush1.msra.mxu0 0.0
    %341 = vmatprep.subr.mxu0 0.0
    %342 = vmatpush1.msra.mxu0 0.0
    %343 = vmatprep.subr.mxu0 0.0
    %344 = vmatpush1.msra.mxu0 0.0
    %345 = vmatprep.subr.mxu0 0.0
    %346 = vmatpush1.msra.mxu0 0.0
    %347 = vmatprep.subr.mxu0 0.0
    %348 = vmatpush1.msra.mxu0 0.0
    %349 = vmatprep.subr.mxu0 0.0
    %350 = vmatpush1.msra.mxu0 0.0
    %351 = vmatprep.subr.mxu0 0.0
    %352 = vmatpush1.msra.mxu0 0.0
    %353 = vmatprep.subr.mxu0 0.0
    %354 = vmatpush1.msra.mxu0 0.0
    %355 = vmatprep.subr.mxu0 0.0
    %356 = vmatpush1.msra.mxu0 0.0
    %357 = vmatprep.subr.mxu0 0.0
    %358 = vmatpush1.msra.mxu0 0.0
    %359 = vmatprep.subr.mxu0 0.0
    %360 = vmatpush1.msra.mxu0 0.0
    %361 = vmatprep.subr.mxu0 0.0
    %362 = vmatpush1.msra.mxu0 0.0
    %363 = vmatprep.subr.mxu0 0.0
    %364 = vmatpush1.msra.mxu0 0.0
    %365 = vmatprep.subr.mxu0 0.0
    %366 = vmatpush1.msra.mxu0 0.0
    %367 = vmatprep.mubr.f32.mxu0 0.0
    %368 = vmatmul.mubr.f32.gmra.mrb[0].mxu0 %v264
    %v369 = vpop.f32.mrb[0].mxu0
    %v370 = vadd.f32 %v301, %v369
    %v371 = vpop.f32.mrb[0].mxu0
    %372 = vmatprep.mubr.f32.mxu0 0.0
    %373 = vmatmul.mubr.f32.gmra.mrb[0].mxu0 %v265
    %v374 = vpop.f32.mrb[0].mxu0
    %v375 = vadd.f32 %v301, %v374
    %v376 = vpop.f32.mrb[0].mxu0
    %377 = vmatprep.mubr.f32.mxu0 0.0
    %378 = vmatmul.mubr.f32.gmra.mrb[0].mxu0 %v266
    %v379 = vpop.f32.mrb[0].mxu0
    %v380 = vadd.f32 %v301, %v379
    %v381 = vpop.f32.mrb[0].mxu0
    %382 = vmatprep.mubr.f32.mxu0 0.0
    %383 = vmatmul.mubr.f32.gmra.mrb[0].mxu0 %v267
    %v384 = vpop.f32.mrb[0].mxu0
    %v385 = vadd.f32 %v301, %v384
    %v386 = vpop.f32.mrb[0].mxu0
    %387 = vmatprep.mubr.f32.mxu0 0.0
    %388 = vmatmul.mubr.f32.gmra.mrb[0].mxu0 %v268
    %v389 = vpop.f32.mrb[0].mxu0
    %v390 = vadd.f32 %v301, %v389
    %v391 = vpop.f32.mrb[0].mxu0
    %392 = vmatprep.mubr.f32.mxu0 0.0
    %393 = vmatmul.mubr.f32.gmra.mrb[0].mxu0 %v269
    %v394 = vpop.f32.mrb[0].mxu0
    %v395 = vadd.f32 %v301, %v394
    %v396 = vpop.f32.mrb[0].mxu0
    %397 = vmatprep.mubr.f32.mxu0 0.0
    %398 = vmatmul.mubr.f32.gmra.mrb[0].mxu0 %v270
    %v399 = vpop.f32.mrb[0].mxu0
    %v400 = vadd.f32 %v301, %v399
    %v401 = vpop.f32.mrb[0].mxu0
    %402 = vmatprep.mubr.f32.mxu0 0.0
    %403 = vmatmul.mubr.f32.gmra.mrb[0].mxu0 %v271
    %v404 = vpop.f32.mrb[0].mxu0
    %v405 = vadd.f32 %v301, %v404
    %v406 = vpop.f32.mrb[0].mxu0
    %407 = vmatprep.mubr.f32.mxu0 0.0
    %408 = vmatmul.mubr.f32.gmra.mrb[0].mxu0 %v272
    %v409 = vpop.f32.mrb[0].mxu0
    %v410 = vadd.f32 %v301, %v409
    %v411 = vpop.f32.mrb[0].mxu0
    %412 = vmatprep.mubr.f32.mxu0 0.0
    %413 = vmatmul.mubr.f32.gmra.mrb[0].mxu0 %v273
    %v414 = vpop.f32.mrb[0].mxu0
    %v415 = vadd.f32 %v301, %v414
    %v416 = vpop.f32.mrb[0].mxu0
    %417 = vmatprep.mubr.f32.mxu0 0.0
    %418 = vmatmul.mubr.f32.gmra.mrb[0].mxu0 %v274
    %v419 = vpop.f32.mrb[0].mxu0
    %v420 = vadd.f32 %v301, %v419
    %v421 = vpop.f32.mrb[0].mxu0
    %422 = vmatprep.mubr.f32.mxu0 0.0
    %423 = vmatmul.mubr.f32.gmra.mrb[0].mxu0 %v275
    %v424 = vpop.f32.mrb[0].mxu0
    %v425 = vadd.f32 %v301, %v424
    %v426 = vpop.f32.mrb[0].mxu0
    %427 = vmatprep.mubr.f32.mxu0 0.0
    %428 = vmatmul.mubr.f32.gmra.mrb[0].mxu0 %v276
    %v429 = vpop.f32.mrb[0].mxu0
    %v430 = vadd.f32 %v301, %v429
    %v431 = vpop.f32.mrb[0].mxu0
    %432 = vmatprep.mubr.f32.mxu0 0.0
    %433 = vmatmul.mubr.f32.gmra.mrb[0].mxu0 %v277
    %v434 = vpop.f32.mrb[0].mxu0
    %v435 = vadd.f32 %v301, %v434
    %v436 = vpop.f32.mrb[0].mxu0
    %437 = vmatprep.mubr.f32.mxu0 0.0
    %438 = vmatmul.mubr.f32.gmra.mrb[0].mxu0 %v278
    %v439 = vpop.f32.mrb[0].mxu0
    %v440 = vadd.f32 %v301, %v439
    %v441 = vpop.f32.mrb[0].mxu0
    %442 = vmatprep.mubr.f32.mxu0 0.0
    %443 = vmatmul.mubr.f32.gmra.mrb[0].mxu0 %v279
    %v444 = vpop.f32.mrb[0].mxu0
    %v445 = vadd.f32 %v301, %v444
    %v446 = vpop.f32.mrb[0].mxu0
    %447 = vdwg.mxu0
    %v448 = vmax.f32 %v370, 0.0
    %v449 = vmax.f32 %v375, 0.0
    %v450 = vmax.f32 %v380, 0.0
    %v451 = vmax.f32 %v385, 0.0
    %v452 = vmax.f32 %v390, 0.0
    %v453 = vmax.f32 %v395, 0.0
    %v454 = vmax.f32 %v400, 0.0
    %v455 = vmax.f32 %v405, 0.0
    %v456 = vmax.f32 %v410, 0.0
    %v457 = vmax.f32 %v415, 0.0
    %v458 = vmax.f32 %v420, 0.0
    %v459 = vmax.f32 %v425, 0.0
    %v460 = vmax.f32 %v430, 0.0
    %v461 = vmax.f32 %v435, 0.0
    %v462 = vmax.f32 %v440, 0.0
    %v463 = vmax.f32 %v445, 0.0
    %v464 = vld [vmem:[#allocation4] sm:$0xff]
    %v465 = vld [vmem:[#allocation4 + $0x8] sm:$0xff]
    %v466 = vld [vmem:[#allocation4 + $0x10] sm:$0xff]
    %v467 = vld [vmem:[#allocation4 + $0x18] sm:$0xff]
    %v468 = vld [vmem:[#allocation4 + $0x20] sm:$0xff]
    %v469 = vld [vmem:[#allocation4 + $0x28] sm:$0xff]
    %v470 = vld [vmem:[#allocation4 + $0x30] sm:$0xff]
    %v471 = vld [vmem:[#allocation4 + $0x38] sm:$0xff]
    %v472 = vld [vmem:[#allocation4 + $0x40] sm:$0xff]
    %v473 = vld [vmem:[#allocation4 + $0x48] sm:$0xff]
    %v474 = vld [vmem:[#allocation4 + $0x50] sm:$0xff]
    %v475 = vld [vmem:[#allocation4 + $0x58] sm:$0xff]
    %v476 = vld [vmem:[#allocation4 + $0x60] sm:$0xff]
    %v477 = vld [vmem:[#allocation4 + $0x68] sm:$0xff]
    %v478 = vld [vmem:[#allocation4 + $0x70] sm:$0xff]
    %v479 = vld [vmem:[#allocation4 + $0x78] sm:$0xff]
    %v480 = vld [vmem:[%s7] sm:$0x1]
    %v482 = vlaneseq
    %v483 = vshrl.u32 %v482, 7
    %v484 = vsub.s32 0, %v483
    %v485 = vrot.slane %v480, %v484
    %487 = vmatprep.subr.mxu0 0.0
    %488 = vmatpush1.msra.mxu0 %v464
    %489 = vmatprep.subr.mxu0 0.0
    %490 = vmatpush1.msra.mxu0 %v465
    %491 = vmatprep.subr.mxu0 0.0
    %492 = vmatpush1.msra.mxu0 %v466
    %493 = vmatprep.subr.mxu0 0.0
    %494 = vmatpush1.msra.mxu0 %v467
    %495 = vmatprep.subr.mxu0 0.0
    %496 = vmatpush1.msra.mxu0 %v468
    %497 = vmatprep.subr.mxu0 0.0
    %498 = vmatpush1.msra.mxu0 %v469
    %499 = vmatprep.subr.mxu0 0.0
    %500 = vmatpush1.msra.mxu0 %v470
    %501 = vmatprep.subr.mxu0 0.0
    %502 = vmatpush1.msra.mxu0 %v471
    %503 = vmatprep.subr.mxu0 0.0
    %504 = vmatpush1.msra.mxu0 %v472
    %505 = vmatprep.subr.mxu0 0.0
    %506 = vmatpush1.msra.mxu0 %v473
    %507 = vmatprep.subr.mxu0 0.0
    %508 = vmatpush1.msra.mxu0 %v474
    %509 = vmatprep.subr.mxu0 0.0
    %510 = vmatpush1.msra.mxu0 %v475
    %511 = vmatprep.subr.mxu0 0.0
    %512 = vmatpush1.msra.mxu0 %v476
    %513 = vmatprep.subr.mxu0 0.0
    %514 = vmatpush1.msra.mxu0 %v477
    %515 = vmatprep.subr.mxu0 0.0
    %516 = vmatpush1.msra.mxu0 %v478
    %517 = vmatprep.subr.mxu0 0.0
    %518 = vmatpush1.msra.mxu0 %v479
    %519 = vmatprep.subr.mxu0 0.0
    %520 = vmatpush1.msra.mxu0 0.0
    %521 = vmatprep.subr.mxu0 0.0
    %522 = vmatpush1.msra.mxu0 0.0
    %523 = vmatprep.subr.mxu0 0.0
    %524 = vmatpush1.msra.mxu0 0.0
    %525 = vmatprep.subr.mxu0 0.0
    %526 = vmatpush1.msra.mxu0 0.0
    %527 = vmatprep.subr.mxu0 0.0
    %528 = vmatpush1.msra.mxu0 0.0
    %529 = vmatprep.subr.mxu0 0.0
    %530 = vmatpush1.msra.mxu0 0.0
    %531 = vmatprep.subr.mxu0 0.0
    %532 = vmatpush1.msra.mxu0 0.0
    %533 = vmatprep.subr.mxu0 0.0
    %534 = vmatpush1.msra.mxu0 0.0
    %535 = vmatprep.subr.mxu0 0.0
    %536 = vmatpush1.msra.mxu0 0.0
    %537 = vmatprep.subr.mxu0 0.0
    %538 = vmatpush1.msra.mxu0 0.0
    %539 = vmatprep.subr.mxu0 0.0
    %540 = vmatpush1.msra.mxu0 0.0
    %541 = vmatprep.subr.mxu0 0.0
    %542 = vmatpush1.msra.mxu0 0.0
    %543 = vmatprep.subr.mxu0 0.0
    %544 = vmatpush1.msra.mxu0 0.0
    %545 = vmatprep.subr.mxu0 0.0
    %546 = vmatpush1.msra.mxu0 0.0
    %547 = vmatprep.subr.mxu0 0.0
    %548 = vmatpush1.msra.mxu0 0.0
    %549 = vmatprep.subr.mxu0 0.0
    %550 = vmatpush1.msra.mxu0 0.0
    %551 = vmatprep.mubr.f32.mxu0 0.0
    %552 = vmatmul.mubr.f32.gmra.mrb[0].mxu0 %v448
    %v553 = vpop.f32.mrb[0].mxu0
    %v554 = vadd.f32 %v485, %v553
    %v555 = vpop.f32.mrb[0].mxu0
    %556 = vmatprep.mubr.f32.mxu0 0.0
    %557 = vmatmul.mubr.f32.gmra.mrb[0].mxu0 %v449
    %v558 = vpop.f32.mrb[0].mxu0
    %v559 = vadd.f32 %v485, %v558
    %v560 = vpop.f32.mrb[0].mxu0
    %561 = vmatprep.mubr.f32.mxu0 0.0
    %562 = vmatmul.mubr.f32.gmra.mrb[0].mxu0 %v450
    %v563 = vpop.f32.mrb[0].mxu0
    %v564 = vadd.f32 %v485, %v563
    %v565 = vpop.f32.mrb[0].mxu0
    %566 = vmatprep.mubr.f32.mxu0 0.0
    %567 = vmatmul.mubr.f32.gmra.mrb[0].mxu0 %v451
    %v568 = vpop.f32.mrb[0].mxu0
    %v569 = vadd.f32 %v485, %v568
    %v570 = vpop.f32.mrb[0].mxu0
    %571 = vmatprep.mubr.f32.mxu0 0.0
    %572 = vmatmul.mubr.f32.gmra.mrb[0].mxu0 %v452
    %v573 = vpop.f32.mrb[0].mxu0
    %v574 = vadd.f32 %v485, %v573
    %v575 = vpop.f32.mrb[0].mxu0
    %576 = vmatprep.mubr.f32.mxu0 0.0
    %577 = vmatmul.mubr.f32.gmra.mrb[0].mxu0 %v453
    %v578 = vpop.f32.mrb[0].mxu0
    %v579 = vadd.f32 %v485, %v578
    %v580 = vpop.f32.mrb[0].mxu0
    %581 = vmatprep.mubr.f32.mxu0 0.0
    %582 = vmatmul.mubr.f32.gmra.mrb[0].mxu0 %v454
    %v583 = vpop.f32.mrb[0].mxu0
    %v584 = vadd.f32 %v485, %v583
    %v585 = vpop.f32.mrb[0].mxu0
    %586 = vmatprep.mubr.f32.mxu0 0.0
    %587 = vmatmul.mubr.f32.gmra.mrb[0].mxu0 %v455
    %v588 = vpop.f32.mrb[0].mxu0
    %v589 = vadd.f32 %v485, %v588
    %v590 = vpop.f32.mrb[0].mxu0
    %591 = vmatprep.mubr.f32.mxu0 0.0
    %592 = vmatmul.mubr.f32.gmra.mrb[0].mxu0 %v456
    %v593 = vpop.f32.mrb[0].mxu0
    %v594 = vadd.f32 %v485, %v593
    %v595 = vpop.f32.mrb[0].mxu0
    %596 = vmatprep.mubr.f32.mxu0 0.0
    %597 = vmatmul.mubr.f32.gmra.mrb[0].mxu0 %v457
    %v598 = vpop.f32.mrb[0].mxu0
    %v599 = vadd.f32 %v485, %v598
    %v600 = vpop.f32.mrb[0].mxu0
    %601 = vmatprep.mubr.f32.mxu0 0.0
    %602 = vmatmul.mubr.f32.gmra.mrb[0].mxu0 %v458
    %v603 = vpop.f32.mrb[0].mxu0
    %v604 = vadd.f32 %v485, %v603
    %v605 = vpop.f32.mrb[0].mxu0
    %606 = vmatprep.mubr.f32.mxu0 0.0
    %607 = vmatmul.mubr.f32.gmra.mrb[0].mxu0 %v459
    %v608 = vpop.f32.mrb[0].mxu0
    %v609 = vadd.f32 %v485, %v608
    %v610 = vpop.f32.mrb[0].mxu0
    %611 = vmatprep.mubr.f32.mxu0 0.0
    %612 = vmatmul.mubr.f32.gmra.mrb[0].mxu0 %v460
    %v613 = vpop.f32.mrb[0].mxu0
    %v614 = vadd.f32 %v485, %v613
    %v615 = vpop.f32.mrb[0].mxu0
    %616 = vmatprep.mubr.f32.mxu0 0.0
    %617 = vmatmul.mubr.f32.gmra.mrb[0].mxu0 %v461
    %v618 = vpop.f32.mrb[0].mxu0
    %v619 = vadd.f32 %v485, %v618
    %v620 = vpop.f32.mrb[0].mxu0
    %621 = vmatprep.mubr.f32.mxu0 0.0
    %622 = vmatmul.mubr.f32.gmra.mrb[0].mxu0 %v462
    %v623 = vpop.f32.mrb[0].mxu0
    %v624 = vadd.f32 %v485, %v623
    %v625 = vpop.f32.mrb[0].mxu0
    %626 = vmatprep.mubr.f32.mxu0 0.0
    %627 = vmatmul.mubr.f32.gmra.mrb[0].mxu0 %v463
    %v628 = vpop.f32.mrb[0].mxu0
    %v629 = vadd.f32 %v485, %v628
    %v630 = vpop.f32.mrb[0].mxu0
    %631 = vdwg.mxu0
    %632 = vxpose.xlu0.b32.start [1/16] %v554, 128
    %633 = vxpose.xlu0.b32.cont [2/16] %v559, 128
    %634 = vxpose.xlu0.b32.cont [3/16] %v564, 128
    %635 = vxpose.xlu0.b32.cont [4/16] %v569, 128
    %636 = vxpose.xlu0.b32.cont [5/16] %v574, 128
    %637 = vxpose.xlu0.b32.cont [6/16] %v579, 128
    %638 = vxpose.xlu0.b32.cont [7/16] %v584, 128
    %639 = vxpose.xlu0.b32.cont [8/16] %v589, 128
    %640 = vxpose.xlu0.b32.cont [9/16] %v594, 128
    %641 = vxpose.xlu0.b32.cont [10/16] %v599, 128
    %642 = vxpose.xlu0.b32.cont [11/16] %v604, 128
    %643 = vxpose.xlu0.b32.cont [12/16] %v609, 128
    %644 = vxpose.xlu0.b32.cont [13/16] %v614, 128
    %645 = vxpose.xlu0.b32.cont [14/16] %v619, 128
    %646 = vxpose.xlu0.b32.cont [15/16] %v624, 128
    %647 = vxpose.xlu0.b32.end [16/16] %v629, 128
    %v648 = vpop.trf.xlu0
    %v649 = vpop.trf.xlu0
    %v650 = vpop.trf.xlu0
    %v651 = vpop.trf.xlu0
    %v652 = vpop.trf.xlu0
    %v653 = vpop.trf.xlu0
    %v654 = vpop.trf.xlu0
    %v655 = vpop.trf.xlu0
    %v656 = vpop.trf.xlu0
    %v657 = vpop.trf.xlu0
    %v658 = vpop.trf.xlu0
    %v659 = vpop.trf.xlu0
    %v660 = vpop.trf.xlu0
    %v661 = vpop.trf.xlu0
    %v662 = vpop.trf.xlu0
    %v663 = vpop.trf.xlu0
    %v664 = vxor.u32 %v648, 2147483648
    %v665 = vmul.f32 %v664, 1.442695
    %v666 = vpow.pop %v665
    %v667 = vadd.f32 %v666, 1.0
    %v668 = vrcp.pop %v667
    %v669 = vmul.f32 1.0, %v668
    %670 = vst [vmem:[#allocation7] sm:$0x1] %v669
    // Predicated region
    $region34: #{tpu_custom_call.1} parent=1 // pred_check
      _
    $region35: #{tpu_custom_call.1} parent=1 // pred_check_branch
      %672 = sbr.rel (0) target = $region37
    $region36: #{tpu_custom_call.1} parent=1 // pred_region
      %s674 = ssub.s32 16, 16
      %675 = vsyncadd [#allocation6], %s674
      %s677 = sshll.u32 [#allocation7], 4
      %s678 = int_to_ptr.vmem [resolvable:$true] %s677
      %680 = dma.vmem_to_hbm [thread:$0]  %s678, 16, %s8, [#allocation6]
    $region37: #{tpu_custom_call.1} parent=1 // pred_fallthru
      _
    // Predicated region
    $region38: #{tpu_custom_call.1} parent=1 // pred_check
      _
    $region39: #{tpu_custom_call.1} parent=1 // pred_check_branch
      %682 = sbr.rel (0) target = $region41
    $region40: #{tpu_custom_call.1} parent=1 // pred_region
      %683 = dma.done [#allocation6], 16
    $region41: #{tpu_custom_call.1} parent=1 // pred_fallthru
      _
    %684 = vsyncpa [#allocation5], 1
    %685 = vsyncpa [#allocation6], 1

</llo_original>
